<compile_context>
chip_gen: v5e
topology: v5e:2x2
jax: 0.10.0
libtpu: 0.0.40
codegen_flags: <defaults>
</compile_context>

<pallas_src>
import functools

import jax
import jax.numpy as jnp
from jax.experimental import pallas as pl
from jax.experimental.pallas import tpu as pltpu


def _conv_block_kernel(x_ref, w_ref, p_ref, o_ref, *, L_out, eps, inv_count):
    # x_ref: (1, K*C_in, L_pad)  one sample, im2col'd, contraction on sublanes
    # w_ref: (C_out, K*C_in)     conv weight, flattened (c-major, k-minor)
    # p_ref: (C_out, 3)          columns: [bias, gamma, beta]  (f32)
    # o_ref: (1, C_out, L_pad)   output for this sample (NCL layout)
    x = x_ref[0]                                                   # (KC, Lp)

    # conv1: single MXU contraction over K*C_in, f32 accumulation.
    acc = jnp.dot(w_ref[...], x, preferred_element_type=jnp.float32)  # (C_out, Lp)
    acc = acc + p_ref[:, 0:1]                                      # conv bias

    Lp = acc.shape[-1]
    if Lp != L_out:
        # Exclude padded lane positions from the GroupNorm statistics.
        lane = jax.lax.broadcasted_iota(jnp.int32, (1, Lp), 1)
        acc_m = jnp.where(lane < L_out, acc, 0.0)
    else:
        acc_m = acc

    # GroupNorm(num_groups=1) for this sample: plain scalar reductions.
    s = jnp.sum(acc_m)
    sq = jnp.sum(acc_m * acc_m)
    mean = s * inv_count
    var = jnp.maximum(sq * inv_count - mean * mean, 0.0)
    rstd = jax.lax.rsqrt(var + eps)

    # Fold normalize + per-channel affine into one scale/shift, then ReLU.
    scale = rstd * p_ref[:, 1:2]                                   # (C_out, 1)
    shift = p_ref[:, 2:3] - mean * scale                           # (C_out, 1)
    y = acc * scale + shift
    o_ref[0] = jnp.maximum(y, 0.0).astype(o_ref.dtype)


def conv_block_1d(x, w, b, gamma, beta, *, stride, padding, eps=1e-5,
                  matmul_dtype=jnp.bfloat16):
    """x: (N, C_in, L) f32, w: (C_out, C_in, K), b/gamma/beta: (C_out,).
    Returns (N, C_out, L_out) f32, matching the PyTorch module's forward.
    matmul_dtype=jnp.bfloat16 (default) feeds the MXU bf16 operands with f32
    accumulation; pass jnp.float32 for strict f32 parity."""
    N, C_in, L = x.shape
    C_out, _, K = w.shape
    L_out = (L + 2 * padding - K) // stride + 1
    KC = C_in * K
    Lp = max(128, ((L_out + 127) // 128) * 128)  # lane-dense output blocks

    # ---- wrapper glue (layout only, already in final kernel layout) ----
    x_pad = jnp.pad(x.astype(jnp.float32), ((0, 0), (0, 0), (padding, padding)))
    taps = [x_pad[:, :, k: k + stride * (L_out - 1) + 1: stride]
            for k in range(K)]                                     # K x (N, C_in, L_out)
    x_im = jnp.stack(taps, axis=2).reshape(N, KC, L_out)           # c-major, k-minor
    if Lp != L_out:
        x_im = jnp.pad(x_im, ((0, 0), (0, 0), (0, Lp - L_out)))
    x_im = x_im.astype(matmul_dtype)                               # (N, KC, Lp)

    w_flat = w.reshape(C_out, KC).astype(matmul_dtype)             # (C_out, KC)
    params = jnp.stack([b, gamma, beta], axis=1).astype(jnp.float32)  # (C_out, 3)

    kernel = functools.partial(_conv_block_kernel, L_out=L_out, eps=eps,
                               inv_count=1.0 / (L_out * C_out))

    # VMEM budget from the per-block double-buffered footprint, capped for v7x.
    itemsize = jnp.dtype(matmul_dtype).itemsize
    blk_bytes = 2 * (KC * Lp * itemsize            # x block (double-buffered)
                     + C_out * Lp * 4              # out block
                     + C_out * KC * itemsize       # weight
                     + C_out * 3 * 4)              # params
    vmem_limit = int(min(32 << 20, max(4 << 20, 4 * blk_bytes)))

    out = pl.pallas_call(
        kernel,
        out_shape=jax.ShapeDtypeStruct((N, C_out, Lp), jnp.float32),
        grid=(N,),
        in_specs=[
            pl.BlockSpec((1, KC, Lp), lambda n: (n, 0, 0)),
            pl.BlockSpec((C_out, KC), lambda n: (0, 0)),
            pl.BlockSpec((C_out, 3), lambda n: (0, 0)),
        ],
        out_specs=pl.BlockSpec((1, C_out, Lp), lambda n: (n, 0, 0)),
        compiler_params=pltpu.CompilerParams(
            dimension_semantics=("parallel",),
            vmem_limit_bytes=vmem_limit),
    )(x_im, w_flat, params)

    # Only the lane padding is dropped; output is already in NCL layout.
    return out[:, :, :L_out]


def _reference(x, w, b, gamma, beta, *, stride, padding, eps=1e-5):
    """Plain-JAX reference reproducing the PyTorch forward."""
    y = jax.lax.conv_general_dilated(
        x, w, window_strides=(stride,), padding=[(padding, padding)],
        dimension_numbers=("NCH", "OIH", "NCH"))
    y = y + b[None, :, None]
    mean = jnp.mean(y, axis=(1, 2), keepdims=True)
    var = jnp.mean((y - mean) ** 2, axis=(1, 2), keepdims=True)
    y = (y - mean) * jax.lax.rsqrt(var + eps)
    y = y * gamma[None, :, None] + beta[None, :, None]
    return jnp.maximum(y, 0.0)


if __name__ == "__main__":
    # Shapes consistent with ConvBlock1D(in_channels=4, out_channels=8,
    # kernel_size=3, stride=1, padding=1) applied to x of shape (2, 4, 16).
    N, C_in, C_out, L = 2, 4, 8, 16
    K, stride, padding = 3, 1, 1

    key = jax.random.PRNGKey(0)
    kx, kw, kb, kg, kbe = jax.random.split(key, 5)

    x = jax.random.normal(kx, (N, C_in, L), dtype=jnp.float32)
    # Deterministic synthetic parameter init (not a checkpoint load).
    w = jax.random.normal(kw, (C_out, C_in, K), dtype=jnp.float32) * 0.2
    b = jax.random.normal(kb, (C_out,), dtype=jnp.float32) * 0.1
    gamma = 1.0 + 0.1 * jax.random.normal(kg, (C_out,), dtype=jnp.float32)
    beta = 0.1 * jax.random.normal(kbe, (C_out,), dtype=jnp.float32)

    ref = _reference(x, w, b, gamma, beta, stride=stride, padding=padding)

    # f32 operand path: strict parity with the PyTorch/f32 semantics.
    out_f32 = conv_block_1d(x, w, b, gamma, beta, stride=stride,
                            padding=padding, matmul_dtype=jnp.float32)
    out_f32 = jax.block_until_ready(out_f32)
    assert out_f32.shape == ref.shape, (out_f32.shape, ref.shape)
    assert jnp.allclose(out_f32, ref, atol=5e-4, rtol=5e-4), \
        float(jnp.max(jnp.abs(out_f32 - ref)))

    # Default bf16 MXU-operand fast path (f32 accumulate / f32 GroupNorm math).
    out_bf16 = conv_block_1d(x, w, b, gamma, beta, stride=stride,
                             padding=padding)
    out_bf16 = jax.block_until_ready(out_bf16)
    assert out_bf16.shape == ref.shape, (out_bf16.shape, ref.shape)
    assert jnp.allclose(out_bf16, ref, atol=5e-2, rtol=5e-2), \
        float(jnp.max(jnp.abs(out_bf16 - ref)))

    print("KERNEL_OK")
</pallas_src>

<mosaic_0001>
module attributes {stable_mosaic.version = 11 : i64} {
  func.func @_conv_block_kernel(%arg0: i32, %arg1: memref<1x12x128xf32, #tpu.memory_space<vmem>>, %arg2: memref<8x12xf32, #tpu.memory_space<vmem>>, %arg3: memref<8x3xf32, #tpu.memory_space<vmem>>, %arg4: memref<1x8x128xf32, #tpu.memory_space<vmem>>) attributes {dimension_semantics = [#tpu.dimension_semantics<parallel>], iteration_bounds = array<i64: 2>, scalar_prefetch = 0 : i64, scratch_operands = 0 : i64, tpu.core_type = #tpu.core_type<tc>, window_params = [{transform_indices = @transform_0, window_bounds = array<i64: 1, 12, 128>}, {pipeline_mode = #tpu.pipeline_mode<synchronous>, transform_indices = @transform_1, window_bounds = array<i64: 8, 12>}, {pipeline_mode = #tpu.pipeline_mode<synchronous>, transform_indices = @transform_2, window_bounds = array<i64: 8, 3>}, {transform_indices = @transform_3, window_bounds = array<i64: 1, 8, 128>}]} {
    %c0 = arith.constant 0 : index
    %c0_0 = arith.constant 0 : index
    %c0_1 = arith.constant 0 : index
    %0 = vector.load %arg1[%c0, %c0_0, %c0_1] : memref<1x12x128xf32, #tpu.memory_space<vmem>>, vector<1x12x128xf32>
    %1 = vector.shape_cast %0 : vector<1x12x128xf32> to vector<12x128xf32>
    %c0_2 = arith.constant 0 : index
    %c0_3 = arith.constant 0 : index
    %2 = vector.load %arg2[%c0_2, %c0_3] : memref<8x12xf32, #tpu.memory_space<vmem>>, vector<8x12xf32>
    %cst = arith.constant dense<0.000000e+00> : vector<8x128xf32>
    %3 = tpu.matmul %2, %1, %cst {dimension_numbers = #tpu.dot_dimension_numbers<[1], [0], [0], [1], [0, 0, 1, 1], [], []>} : vector<8x12xf32>, vector<12x128xf32>, vector<8x128xf32> -> vector<8x128xf32>
    %c0_4 = arith.constant 0 : index
    %c0_5 = arith.constant 0 : index
    %4 = vector.load %arg3[%c0_4, %c0_5] : memref<8x3xf32, #tpu.memory_space<vmem>>, vector<8x1xf32>
    %5 = vector.broadcast %4 : vector<8x1xf32> to vector<8x128xf32>
    %6 = arith.addf %3, %5 : vector<8x128xf32>
    %7 = tpu.iota {dimensions = array<i32: 1>} : vector<1x128xi32>
    %c16_i32 = arith.constant 16 : i32
    %8 = vector.broadcast %c16_i32 : i32 to vector<1x128xi32>
    %9 = arith.cmpi slt, %7, %8 : vector<1x128xi32>
    %cst_6 = arith.constant 0.000000e+00 : f32
    %10 = vector.shape_cast %9 : vector<1x128xi1> to vector<1x128xi1>
    %11 = vector.broadcast %10 : vector<1x128xi1> to vector<8x128xi1>
    %12 = vector.broadcast %cst_6 : f32 to vector<8x128xf32>
    %13 = arith.select %11, %6, %12 : vector<8x128xi1>, vector<8x128xf32>
    %14 = vector.shape_cast %13 : vector<8x128xf32> to vector<1x8x128xf32>
    %cst_7 = arith.constant dense<0.000000e+00> : vector<1xf32>
    %15 = vector.multi_reduction <add>, %14, %cst_7 [1, 2] : vector<1x8x128xf32> to vector<1xf32>
    %16 = vector.shape_cast %15 : vector<1xf32> to vector<1x1x1xf32>
    %17 = vector.extract %16[0, 0, 0] : f32 from vector<1x1x1xf32>
    %18 = arith.mulf %13, %13 : vector<8x128xf32>
    %19 = vector.shape_cast %18 : vector<8x128xf32> to vector<1x8x128xf32>
    %cst_8 = arith.constant dense<0.000000e+00> : vector<1xf32>
    %20 = vector.multi_reduction <add>, %19, %cst_8 [1, 2] : vector<1x8x128xf32> to vector<1xf32>
    %21 = vector.shape_cast %20 : vector<1xf32> to vector<1x1x1xf32>
    %22 = vector.extract %21[0, 0, 0] : f32 from vector<1x1x1xf32>
    %cst_9 = arith.constant 7.812500e-03 : f32
    %23 = arith.mulf %17, %cst_9 : f32
    %cst_10 = arith.constant 7.812500e-03 : f32
    %24 = arith.mulf %22, %cst_10 : f32
    %25 = arith.mulf %23, %23 : f32
    %26 = arith.subf %24, %25 : f32
    %cst_11 = arith.constant 0.000000e+00 : f32
    %27 = arith.maximumf %26, %cst_11 : f32
    %cst_12 = arith.constant 9.99999974E-6 : f32
    %28 = arith.addf %27, %cst_12 : f32
    %29 = math.rsqrt %28 : f32
    %c0_13 = arith.constant 0 : index
    %c1 = arith.constant 1 : index
    %30 = vector.load %arg3[%c0_13, %c1] : memref<8x3xf32, #tpu.memory_space<vmem>>, vector<8x1xf32>
    %31 = vector.broadcast %29 : f32 to vector<8x1xf32>
    %32 = arith.mulf %31, %30 : vector<8x1xf32>
    %c0_14 = arith.constant 0 : index
    %c2 = arith.constant 2 : index
    %33 = vector.load %arg3[%c0_14, %c2] : memref<8x3xf32, #tpu.memory_space<vmem>>, vector<8x1xf32>
    %34 = vector.broadcast %23 : f32 to vector<8x1xf32>
    %35 = arith.mulf %34, %32 : vector<8x1xf32>
    %36 = arith.subf %33, %35 : vector<8x1xf32>
    %37 = vector.broadcast %32 : vector<8x1xf32> to vector<8x128xf32>
    %38 = arith.mulf %6, %37 : vector<8x128xf32>
    %39 = vector.broadcast %36 : vector<8x1xf32> to vector<8x128xf32>
    %40 = arith.addf %38, %39 : vector<8x128xf32>
    %cst_15 = arith.constant 0.000000e+00 : f32
    %41 = vector.broadcast %cst_15 : f32 to vector<8x128xf32>
    %42 = arith.maximumf %40, %41 : vector<8x128xf32>
    %c0_16 = arith.constant 0 : index
    %c0_17 = arith.constant 0 : index
    %c0_18 = arith.constant 0 : index
    %43 = vector.load %arg4[%c0_16, %c0_17, %c0_18] : memref<1x8x128xf32, #tpu.memory_space<vmem>>, vector<1x8x128xf32>
    %44 = vector.shape_cast %43 : vector<1x8x128xf32> to vector<8x128xf32>
    %45 = vector.shape_cast %42 : vector<8x128xf32> to vector<1x8x128xf32>
    tpu.vector_store %arg4[%c0_16, %c0_17, %c0_18], %45 {strides = array<i32>} : memref<1x8x128xf32, #tpu.memory_space<vmem>>, vector<1x8x128xf32>,
    return
  }
  func.func @transform_0(%arg0: i32) -> (i32, i32, i32) {
    %c0_i32 = arith.constant 0 : i32
    %c0_i32_0 = arith.constant 0 : i32
    %c0_i32_1 = arith.constant 0 : i32
    return %arg0, %c0_i32, %c0_i32_0 : i32, i32, i32
  }
  func.func @transform_1(%arg0: i32) -> (i32, i32) {
    %c0_i32 = arith.constant 0 : i32
    %c0_i32_0 = arith.constant 0 : i32
    %c0_i32_1 = arith.constant 0 : i32
    return %c0_i32, %c0_i32_0 : i32, i32
  }
  func.func @transform_2(%arg0: i32) -> (i32, i32) {
    %c0_i32 = arith.constant 0 : i32
    %c0_i32_0 = arith.constant 0 : i32
    %c0_i32_1 = arith.constant 0 : i32
    return %c0_i32, %c0_i32_0 : i32, i32
  }
  func.func @transform_3(%arg0: i32) -> (i32, i32, i32) {
    %c0_i32 = arith.constant 0 : i32
    %c0_i32_0 = arith.constant 0 : i32
    %c0_i32_1 = arith.constant 0 : i32
    return %arg0, %c0_i32, %c0_i32_0 : i32, i32, i32
  }
}

</mosaic_0001>

<llo_original>
// kernel: tpu_custom_call.1
$region0: #{tpu_custom_call.1}
  #allocation0 [shape = 'u32[]', space=smem, size = 0x4, offset = 0x4, fixed_abs, tag = 'smem constant byte address 0x4 - core index']
  #allocation1 [shape = 'u32[72,128]{1,0:T(1,128)}', space=vmem, size = 0x9000, scoped, tag = 'internal scratch']
  %s0 = inlined_call_operand.vmem [shape: f32[2,12,128], index: 0, kind: input, shape index: {}]
  %s1 = inlined_call_operand.vmem [shape: f32[8,12], index: 1, kind: input, shape index: {}]
  %s2 = inlined_call_operand.vmem [shape: f32[8,3], index: 2, kind: input, shape index: {}]
  %s3 = inlined_call_operand.hbm [shape: f32[2,8,128], index: 3, kind: output, shape index: {}]
  %s4 = sld [smem:[#allocation0]]
  $region45: #{tpu_custom_call.1} parent=0
    _
  %s6 = ssub.s32 1, %s4
  %s7 = scalar_select 0, %s6, %s4
  $region1: #{tpu_custom_call.1} parent=0
    #allocation2 [shape = 'u8[8192]{0}', space=vmem, size = 0x2000, scoped, tag = 'output window, operand 0']
    #allocation3 [shape = 's32[2]{0}', space=sflag, size = 0x8, scoped, tag = 'scoped memory for tpu_custom_call.1']
    %8 = vsyncpa [#allocation3], 0
    %s9 = scalar_lea.sflag [#allocation3], 1
    %10 = vsyncpa %s9, 0
    loop: start=0, step=1, limit=4
    $region2: #{tpu_custom_call.1} parent=1 // loop_pre_header
      _
    $region3: #{tpu_custom_call.1} parent=1 // loop_header
      %s12 = sphi 0, %s16
      %p13 = scmp.ge.s32.totalorder %s12, 4
      %s22 = sphi 0, %s24
      %s25 = sphi 0, %s22
      %s26 = sphi 0, %s25
      %s42 = sphi 0, %s26
      %s46 = sphi 0, %s46
      %s48 = sphi 0, %s46
      %s49 = sphi 0, %s48
      %s63 = sphi 0, %s49
      %s67 = sphi 0, %s67
      %s69 = sphi 0, %s67
      %s70 = sphi 0, %s69
      %s84 = sphi 0, %s70
      %s90 = sphi 0, %s92
      %s93 = sphi 0, %s90
      %s94 = sphi 0, %s93
      %s110 = sphi 0, %s94
    $region4: #{tpu_custom_call.1} parent=1 // loop_header_branch
      %15 = sbr.rel (%p13) target = $region8
    $region5: #{tpu_custom_call.1} parent=1 // loop_body
      %s17 = ssub.s32 %s12, 1
      %s18 = ssub.s32 %s12, 2
      %s19 = sadd.s32 %s12, 1
      %s20 = ssub.s32 %s12, %s19
      %p21 = scmp.eq.s32.totalorder %s20, 0
      %s23 = sadd.s32 %s22, 1
      %s24 = scalar_select %p21, %s22, %s23
      %p27 = pneg %p21
      %p28 = scmp.eq.s32.totalorder %s12, 1
      %p29 = por %p27, %p28
      %p30 = scmp.ne.s32.totalorder %s22, %s25
      %p31 = scmp.eq.s32.totalorder %s12, 0
      %p32 = por %p30, %p31
      %p33 = scmp.ne.s32.totalorder %s22, %s25
      %p34 = scmp.eq.s32.totalorder %s17, 1
      %p35 = por %p33, %p34
      %p36 = scmp.ne.s32.totalorder %s25, %s26
      %p37 = scmp.eq.s32.totalorder %s17, 0
      %p38 = por %p36, %p37
      %p39 = scmp.ne.s32.totalorder %s25, %s26
      %p40 = scmp.eq.s32.totalorder %s18, 1
      %p41 = por %p39, %p40
      %p43 = scmp.ne.s32.totalorder %s26, %s42
      %p44 = scmp.eq.s32.totalorder %s18, 0
      %p45 = por %p43, %p44
      %s47 = sadd.s32 %s46, 1
      %p50 = scmp.eq.s32.totalorder %s12, 1
      %p51 = scmp.ne.s32.totalorder %s46, %s48
      %p52 = scmp.eq.s32.totalorder %s12, 0
      %p53 = por %p51, %p52
      %p54 = scmp.ne.s32.totalorder %s46, %s48
      %p55 = scmp.eq.s32.totalorder %s17, 1
      %p56 = por %p54, %p55
      %p57 = scmp.ne.s32.totalorder %s48, %s49
      %p58 = scmp.eq.s32.totalorder %s17, 0
      %p59 = por %p57, %p58
      %p60 = scmp.ne.s32.totalorder %s48, %s49
      %p61 = scmp.eq.s32.totalorder %s18, 1
      %p62 = por %p60, %p61
      %p64 = scmp.ne.s32.totalorder %s49, %s63
      %p65 = scmp.eq.s32.totalorder %s18, 0
      %p66 = por %p64, %p65
      %s68 = sadd.s32 %s67, 1
      %p71 = scmp.eq.s32.totalorder %s12, 1
      %p72 = scmp.ne.s32.totalorder %s67, %s69
      %p73 = scmp.eq.s32.totalorder %s12, 0
      %p74 = por %p72, %p73
      %p75 = scmp.ne.s32.totalorder %s67, %s69
      %p76 = scmp.eq.s32.totalorder %s17, 1
      %p77 = por %p75, %p76
      %p78 = scmp.ne.s32.totalorder %s69, %s70
      %p79 = scmp.eq.s32.totalorder %s17, 0
      %p80 = por %p78, %p79
      %p81 = scmp.ne.s32.totalorder %s69, %s70
      %p82 = scmp.eq.s32.totalorder %s18, 1
      %p83 = por %p81, %p82
      %p85 = scmp.ne.s32.totalorder %s70, %s84
      %p86 = scmp.eq.s32.totalorder %s18, 0
      %p87 = por %p85, %p86
      %s88 = ssub.s32 %s12, %s19
      %p89 = scmp.eq.s32.totalorder %s88, 0
      %s91 = sadd.s32 %s90, 1
      %s92 = scalar_select %p89, %s90, %s91
      %p95 = pneg %p89
      %p96 = scmp.eq.s32.totalorder %s12, 1
      %p97 = por %p95, %p96
      %p98 = scmp.ne.s32.totalorder %s90, %s93
      %p99 = scmp.eq.s32.totalorder %s12, 0
      %p100 = por %p98, %p99
      %p101 = scmp.ne.s32.totalorder %s90, %s93
      %p102 = scmp.eq.s32.totalorder %s17, 1
      %p103 = por %p101, %p102
      %p104 = scmp.ne.s32.totalorder %s93, %s94
      %p105 = scmp.eq.s32.totalorder %s17, 0
      %p106 = por %p104, %p105
      %p107 = scmp.ne.s32.totalorder %s93, %s94
      %p108 = scmp.eq.s32.totalorder %s18, 1
      %p109 = por %p107, %p108
      %p111 = scmp.ne.s32.totalorder %s94, %s110
      %p112 = scmp.eq.s32.totalorder %s18, 0
      %p113 = por %p111, %p112
      %p114 = scmp.le.s32.totalorder 1, %s12
      %p115 = scmp.lt.s32.totalorder %s12, 3
      %p116 = pnand %p114, %p115
      %p117 = pneg %p116
      // Predicated region
      $region9: #{tpu_custom_call.1} parent=5 // pred_check
        _
      $region10: #{tpu_custom_call.1} parent=5 // pred_check_branch
        %119 = sbr.rel (%p116) target = $region12
      $region11: #{tpu_custom_call.1} parent=5 // pred_region
        %s120 = ssub.s32 %s12, 1
        // Predicated region
        $region13: #{tpu_custom_call.1} parent=11 // pred_check
          %p121 = pneg %p59
        $region14: #{tpu_custom_call.1} parent=11 // pred_check_branch
          %123 = sbr.rel (%p121) target = $region16
        $region15: #{tpu_custom_call.1} parent=11 // pred_region
          _
        $region16: #{tpu_custom_call.1} parent=11 // pred_fallthru
          _
        // Predicated region
        $region17: #{tpu_custom_call.1} parent=11 // pred_check
          %p124 = pneg %p80
        $region18: #{tpu_custom_call.1} parent=11 // pred_check_branch
          %126 = sbr.rel (%p124) target = $region20
        $region19: #{tpu_custom_call.1} parent=11 // pred_region
          _
        $region20: #{tpu_custom_call.1} parent=11 // pred_fallthru
          _
      $region12: #{tpu_custom_call.1} parent=5 // pred_fallthru
        _
      %p127 = scmp.lt.s32.totalorder %s12, 2
      // Predicated region
      $region21: #{tpu_custom_call.1} parent=5 // pred_check
        %p128 = pneg %p127
      $region22: #{tpu_custom_call.1} parent=5 // pred_check_branch
        %130 = sbr.rel (%p128) target = $region24
      $region23: #{tpu_custom_call.1} parent=5 // pred_region
        // Predicated region
        $region25: #{tpu_custom_call.1} parent=23 // pred_check
          %p131 = pneg %p32
        $region26: #{tpu_custom_call.1} parent=23 // pred_check_branch
          %133 = sbr.rel (%p131) target = $region28
        $region27: #{tpu_custom_call.1} parent=23 // pred_region
          %p134 = scmp.lt.s32.totalorder %s12, 1
          %s135 = scalar_select %p134, %s12, 1
          %s136 = smul.addr %s135, 2
          %s137 = smul.addr %s136, 8
          %s138 = scalar_lea.vmem %s0, %s137
        $region28: #{tpu_custom_call.1} parent=23 // pred_fallthru
          _
      $region24: #{tpu_custom_call.1} parent=5 // pred_fallthru
        _
      %p139 = scmp.le.s32.totalorder 1, %s12
      %p140 = scmp.lt.s32.totalorder %s12, 3
      %p141 = pnand %p139, %p140
      %p142 = pneg %p141
      // Predicated region
      $region29: #{tpu_custom_call.1} parent=5 // pred_check
        _
      $region30: #{tpu_custom_call.1} parent=5 // pred_check_branch
        %144 = sbr.rel (%p141) target = $region32
      $region31: #{tpu_custom_call.1} parent=5 // pred_region
        %s145 = ssub.s32 %s12, 1
        %p146 = scmp.lt.s32.totalorder %s17, 1
        %s147 = scalar_select %p146, %s17, 1
        %s148 = smul.addr %s147, 2
        %s149 = smul.addr %s148, 8
        %s150 = scalar_lea.vmem %s0, %s149
        %p151 = pneg %p38
        %p152 = pneg %p35
        %p153 = pneg %p59
        %p154 = pneg %p56
        %p155 = pneg %p80
        %p156 = pneg %p77
        %p157 = pneg %p106
        %p158 = pneg %p103
        %s159 = sand.u32 %s93, 1
        %s160 = scalar_lea.sflag [#allocation3], %s159
        %s161 = sand.u32 %s93, 1
        %s162 = smul.addr %s161, 8
        %s163 = scalar_lea.vmem [#allocation2], %s162
        %p164 = scmp.lt.s32.totalorder %s17, 1
        %s165 = scalar_select %p164, %s17, 1
        %s166 = smul.addr %s165, 2
        %s167 = smul.addr %s166, 8
        %s168 = scalar_lea.vmem %s0, %s167
        %v169 = vld [vmem:[%s168] sm:$0xff]
        %v170 = vld [vmem:[%s168 + $0x8] sm:$0xf]
        %v171 = vld [vmem:[%s1] sm:$0xff]
        %v172 = vld [vmem:[%s2] sm:$0xff]
        %174 = vset.pattern.permute.xlu0 0
        %175 = vperm.xlu0 %174, %v172
        %v176 = vpop.permute.xlu0 %175
        %vm178 = vcmask 97280
        %v180 = vsel %vm178, %v171, 0
        %vm182 = vcmask 1043456
        %v184 = vsel %vm182, %v170, 0
        %186 = vmatpush.msra.mxu0 0.0
        %187 = vmatpush.msra.mxu0 0.0
        %188 = vmatpush.msra.mxu0 0.0
        %189 = vmatpush.msra.mxu0 0.0
        %190 = vmatpush.msra.mxu0 0.0
        %191 = vmatpush.msra.mxu0 0.0
        %192 = vmatpush.msra.mxu0 0.0
        %193 = vmatpush.msra.mxu0 0.0
        %194 = vmatpush.msra.mxu0 0.0
        %195 = vmatpush.msra.mxu0 0.0
        %196 = vmatpush.msra.mxu0 0.0
        %197 = vmatpush.msra.mxu0 0.0
        %198 = vmatpush.msra.mxu0 0.0
        %199 = vmatpush.msra.mxu0 0.0
        %200 = vmatpush.msra.mxu0 %v184
        %201 = vmatpush.msra.mxu0 %v169
        %202 = vmatmul.f32.gmra.mxu0 %v180
        %v203 = vpop.f32.mrf.mxu0
        %v204 = vadd.f32 %v176, %v203
        %205 = vdwg.mxu0
        %v206 = vlaneseq
        %v207 = vand.u32 %v206, 127
        %vm208 = vcmp.lt.s32.totalorder %v207, 16
        %v209 = vsel %vm208, 1, 0
        %vm210 = vcmp.eq.s32.totalorder %v209, 1
        %v211 = vsel %vm210, %v204, 0.0
        %212 = vadd.xlane.f32.xlu0 %v211
        %v213 = vpop.xlane.xlu0 %212
        %v214 = vrot.slane %v213, 4
        %v215 = vadd.f32 %v213, %v214
        %v216 = vrot.slane %v215, 2
        %v217 = vadd.f32 %v215, %v216
        %v218 = vrot.slane %v217, 1
        %v219 = vadd.f32 %v217, %v218
        %s220 = vtos %v219
        %v221 = vmul.f32 %v211, %v211
        %222 = vadd.xlane.f32.xlu0 %v221
        %v223 = vpop.xlane.xlu0 %222
        %v224 = vrot.slane %v223, 4
        %v225 = vadd.f32 %v223, %v224
        %v226 = vrot.slane %v225, 2
        %v227 = vadd.f32 %v225, %v226
        %v228 = vrot.slane %v227, 1
        %v229 = vadd.f32 %v227, %v228
        %s230 = vtos %v229
        %s231 = smul.f32 %s220, 0.0078125
        %s232 = smul.f32 %s230, 0.0078125
        %s233 = smul.f32 %s231, %s231
        %s234 = ssub.f32 %s232, %s233
        %s235 = smax.f32 %s234, 0.0
        %s236 = sadd.f32 %s235, 1e-05
        %v237 = vstv %s236
        %v238 = vrsqrt.pop %v237
        %v239 = vmul.f32 %v238, %v237
        %v240 = vmul.f32 %v239, %v238
        %v241 = vmul.f32 0.5, %v240
        %v242 = vsub.f32 1.5, %v241
        %v243 = vmul.f32 %v238, %v242
        %vm244 = vweird.f32 %v237
        %vm245 = vweird.f32 %v238
        %vm246 = vmor %vm244, %vm245
        %v247 = vsel %vm246, %v238, %v243
        %s248 = vtos %v247
        %v249 = vstv %s248
        %v250 = vmul.f32 %v249, %v172
        %v251 = vstv %s231
        %v252 = vmul.f32 %v251, %v250
        %254 = vrot.lane.b32.xlu0 %v252, 1
        %v255 = vpop.permute.xlu0 %254
        %v257 = vsub.f32 %v172, %v255
        %259 = vset.pattern.permute.xlu0 1
        %260 = vperm.xlu0 %259, %v250
        %v261 = vpop.permute.xlu0 %260
        %v263 = vmul.f32 %v204, %v261
        %265 = vset.pattern.permute.xlu0 2
        %266 = vperm.xlu0 %265, %v257
        %v267 = vpop.permute.xlu0 %266
        %v269 = vadd.f32 %v263, %v267
        %v270 = vmax.f32 %v269, 0.0
        %271 = vst [vmem:[%s163] sm:$0xff] %v270
        %s272 = sand.u32 %s93, 1
        %s273 = scalar_lea.sflag [#allocation3], %s272
        %s274 = sand.u32 %s93, 1
        %s275 = smul.addr %s274, 8
        %s276 = scalar_lea.vmem [#allocation2], %s275
        // Predicated region
        $region33: #{tpu_custom_call.1} parent=31 // pred_check
          %p277 = pneg %p103
        $region34: #{tpu_custom_call.1} parent=31 // pred_check_branch
          %279 = sbr.rel (%p277) target = $region36
        $region35: #{tpu_custom_call.1} parent=31 // pred_region
          %281 = vsyncadd %s273, 0
          %s282 = smul.addr %s17, 8
          %s283 = scalar_lea.hbm %s3, %s282
          %s285 = sshll.u32 %s276, 4
          %s286 = int_to_ptr.vmem [resolvable:$true] %s285
          %s287 = sshll.u32 %s283, 4
          %s288 = int_to_ptr.hbm [resolvable:$true] %s287
          %290 = dma.vmem_to_hbm [thread:$0]  %s286, 128, %s288, %s273
        $region36: #{tpu_custom_call.1} parent=31 // pred_fallthru
          _
      $region32: #{tpu_custom_call.1} parent=5 // pred_fallthru
        _
      %p291 = scmp.le.s32.totalorder 2, %s12
      // Predicated region
      $region37: #{tpu_custom_call.1} parent=5 // pred_check
        %p292 = pneg %p291
      $region38: #{tpu_custom_call.1} parent=5 // pred_check_branch
        %294 = sbr.rel (%p292) target = $region40
      $region39: #{tpu_custom_call.1} parent=5 // pred_region
        %s295 = ssub.s32 %s12, 2
        // Predicated region
        $region41: #{tpu_custom_call.1} parent=39 // pred_check
          %p296 = pneg %p109
        $region42: #{tpu_custom_call.1} parent=39 // pred_check_branch
          %298 = sbr.rel (%p296) target = $region44
        $region43: #{tpu_custom_call.1} parent=39 // pred_region
          %s299 = sand.u32 %s94, 1
          %s300 = scalar_lea.sflag [#allocation3], %s299
          %s301 = sand.u32 %s94, 1
          %s302 = smul.addr %s301, 8
          %s303 = scalar_lea.vmem [#allocation2], %s302
          %305 = dma.done %s300, 128
        $region44: #{tpu_custom_call.1} parent=39 // pred_fallthru
          _
      $region40: #{tpu_custom_call.1} parent=5 // pred_fallthru
        _
    $region6: #{tpu_custom_call.1} parent=1 // loop_footer
      %s16 = sadd.s32 1, %s12
    $region7: #{tpu_custom_call.1} parent=1 // loop_footer_branch
      %11 = sbr.rel target = $region3
    $region8: #{tpu_custom_call.1} parent=1 // loop_exit
      _
    %306 = vsyncpa [#allocation3], 1
    %s307 = scalar_lea.sflag [#allocation3], 1
    %308 = vsyncpa %s307, 1

</llo_original>
